<compile_context>
chip_gen: v7x
topology: tpu7x:2x2x1
jax: 0.10.0
libtpu: 0.0.40
codegen_flags: <defaults>
</compile_context>

<pallas_src>
import functools

import jax
import jax.numpy as jnp
from jax import lax
from jax.experimental import pallas as pl
from jax.experimental.pallas import tpu as pltpu


def _scatter_mats(w: int, s: int, dtype):
    """P[g, r, col] = 1 iff col == (g // s) * (w*s) + r*s + (g % s).

    Shape (s*s, W, s*W*s): encodes both the row phase i = g // s (which W*s
    wide band of the lane-dense output) and the column phase j = g % s.
    """
    shape = (s * s, w, s * w * s)
    g = lax.broadcasted_iota(jnp.int32, shape, 0)
    r = lax.broadcasted_iota(jnp.int32, shape, 1)
    col = lax.broadcasted_iota(jnp.int32, shape, 2)
    i, j = g // s, g % s
    return (col == i * (w * s) + r * s + j).astype(dtype)


def _expand_kernel(x_ref, p_ref, o_ref, *, s: int, c2: int, th: int, w: int):
    # x_ref: (C, Th, W); p_ref: (s*s, W, s*W*s); o_ref: (C2, Th, s*W*s)
    sws = s * w * s
    acc = None
    for g in range(s * s):                       # s^2 channel groups
        a = x_ref[pl.ds(g * c2, c2), :, :]       # (c2, Th, W), static slice
        a2d = a.reshape(c2 * th, w).astype(p_ref.dtype)
        scat = jnp.dot(a2d, p_ref[g],            # (c2*Th, s*W*s)
                       preferred_element_type=p_ref.dtype)
        acc = scat if acc is None else acc + scat
    # One full-width, lane-dense, unstrided store per grid step.
    o_ref[...] = acc.reshape(c2, th, sws).astype(o_ref.dtype)


def _pick_h_tile(h: int, b: int, c: int, w: int,
                 x_itemsize: int, acc_itemsize: int,
                 budget_bytes: int = 16 << 20) -> int:
    """Largest Th (multiple of 8, <= H) whose per-step working set fits budget.

    Per grid step (bytes):
      input block  c*th*w*x_itemsize, double buffered          (x2)
      output block c*th*w*x_itemsize (same element count), x2  (x2)
      acc + scat + store-cast temporaries  ~ 3 * c*th*w*acc_itemsize
    """
    per_row = c * w * (4 * x_itemsize + 3 * acc_itemsize)
    cap = max(1, budget_bytes // per_row)
    if cap >= h:
        th = h
    else:
        th = min(h, max(8, (cap // 8) * 8))
    # v7x megacore: guarantee >= 2 grid steps whenever H allows a clean split.
    if b * pl.cdiv(h, th) < 2 and h >= 16:
        th = max(8, ((h + 1) // 2 + 7) // 8 * 8)
    return th


def expand_pallas(x: jax.Array, gain: int = 2) -> jax.Array:
    """Pallas TPU implementation of Expand.forward (NCHW in, NCHW out)."""
    b, c, h, w = x.shape
    s = int(gain)
    assert c % (s * s) == 0, "channels must be divisible by gain**2"
    c2 = c // (s * s)
    sws = s * w * s

    # Compute dtype: bf16 / f32 stay native (selection matmul is exact there);
    # everything else is routed through f32.
    if x.dtype == jnp.float32 or x.dtype == jnp.bfloat16:
        cdt = x.dtype
    else:
        cdt = jnp.float32
    x_isz = jnp.dtype(x.dtype).itemsize
    c_isz = jnp.dtype(cdt).itemsize

    th = _pick_h_tile(h, b, c, w, x_isz, c_isz)
    n_h = pl.cdiv(h, th)
    grid = (b, n_h)

    p = _scatter_mats(w, s, cdt)   # (s*s, W, s*W*s), resident across the grid

    kernel = functools.partial(_expand_kernel, s=s, c2=c2, th=th, w=w)

    bytes_accessed = 2 * b * c * h * w * x_isz + p.size * c_isz
    flops = 2 * b * c * h * w * sws   # s^2 scatter matmuls per element row

    out = pl.pallas_call(
        kernel,
        out_shape=jax.ShapeDtypeStruct((b, c2, h, sws), x.dtype),
        grid=grid,
        in_specs=[
            # batch dim squeezed out of the kernel ref
            pl.BlockSpec((None, c, th, w), lambda bi, hi: (bi, 0, hi, 0)),
            # tiny constant block: DMA'd once, resident across the grid
            pl.BlockSpec((s * s, w, sws), lambda bi, hi: (0, 0, 0)),
        ],
        out_specs=pl.BlockSpec((None, c2, th, sws),
                               lambda bi, hi: (bi, 0, hi, 0)),
        compiler_params=pltpu.CompilerParams(
            dimension_semantics=("parallel", "parallel"),
            vmem_limit_bytes=48 << 20),
        cost_estimate=pl.CostEstimate(
            flops=flops, transcendentals=0, bytes_accessed=bytes_accessed),
    )(x, p)

    # Metadata-only reshape back to the PyTorch layout (same HBM bytes).
    return out.reshape(b, c2, h * s, w * s)


def expand_reference(x: jax.Array, gain: int = 2) -> jax.Array:
    """Pure-JAX reference mirroring the PyTorch module exactly."""
    b, c, h, w = x.shape
    s = gain
    y = x.reshape(b, s, s, c // s ** 2, h, w)
    y = jnp.transpose(y, (0, 3, 4, 1, 5, 2))
    return y.reshape(b, c // s ** 2, h * s, w * s)


if __name__ == "__main__":
    key = jax.random.PRNGKey(0)
    B, C, H, W = 2, 8, 16, 16   # gain=2  ->  out (2, 2, 32, 32)
    gain = 2

    x = jax.random.normal(key, (B, C, H, W), dtype=jnp.float32)

    out = expand_pallas(x, gain=gain)
    out = jax.block_until_ready(out)

    ref = expand_reference(x, gain=gain)
    assert out.shape == ref.shape, (out.shape, ref.shape)
    assert out.dtype == ref.dtype, (out.dtype, ref.dtype)
    assert bool(jnp.all(out == ref)), "Pallas Expand mismatch vs reference"

    print("KERNEL_OK")
</pallas_src>

<mosaic_0001>
module attributes {stable_mosaic.version = 11 : i64} {
  func.func @_expand_kernel(%arg0: i32, %arg1: i32, %arg2: memref<1x8x16x16xf32, #tpu.memory_space<vmem>>, %arg3: memref<4x16x64xf32, #tpu.memory_space<vmem>>, %arg4: memref<1x2x16x64xf32, #tpu.memory_space<vmem>>) attributes {dimension_semantics = [#tpu.dimension_semantics<parallel>, #tpu.dimension_semantics<parallel>], iteration_bounds = array<i64: 2, 1>, scalar_prefetch = 0 : i64, scratch_operands = 0 : i64, tpu.core_type = #tpu.core_type<tc>, window_params = [{transform_indices = @transform_0, window_bounds = array<i64: 1, 8, 16, 16>}, {pipeline_mode = #tpu.pipeline_mode<synchronous>, transform_indices = @transform_1, window_bounds = array<i64: 4, 16, 64>}, {transform_indices = @transform_2, window_bounds = array<i64: 1, 2, 16, 64>}]} {
    %c0 = arith.constant 0 : index
    %c0_0 = arith.constant 0 : index
    %c0_1 = arith.constant 0 : index
    %c0_2 = arith.constant 0 : index
    %0 = vector.load %arg2[%c0, %c0_0, %c0_1, %c0_2] : memref<1x8x16x16xf32, #tpu.memory_space<vmem>>, vector<1x2x16x16xf32>
    %1 = vector.shape_cast %0 : vector<1x2x16x16xf32> to vector<2x16x16xf32>
    %2 = vector.shape_cast %1 : vector<2x16x16xf32> to vector<32x16xf32>
    %c0_3 = arith.constant 0 : index
    %c0_4 = arith.constant 0 : index
    %c0_5 = arith.constant 0 : index
    %3 = vector.load %arg3[%c0_3, %c0_4, %c0_5] : memref<4x16x64xf32, #tpu.memory_space<vmem>>, vector<1x16x64xf32>
    %4 = vector.shape_cast %3 : vector<1x16x64xf32> to vector<16x64xf32>
    %cst = arith.constant dense<0.000000e+00> : vector<32x64xf32>
    %5 = tpu.matmul %2, %4, %cst {dimension_numbers = #tpu.dot_dimension_numbers<[1], [0], [0], [1], [0, 0, 1, 1], [], []>} : vector<32x16xf32>, vector<16x64xf32>, vector<32x64xf32> -> vector<32x64xf32>
    %c0_6 = arith.constant 0 : index
    %c2 = arith.constant 2 : index
    %c0_7 = arith.constant 0 : index
    %c0_8 = arith.constant 0 : index
    %6 = vector.load %arg2[%c0_6, %c2, %c0_7, %c0_8] : memref<1x8x16x16xf32, #tpu.memory_space<vmem>>, vector<1x2x16x16xf32>
    %7 = vector.shape_cast %6 : vector<1x2x16x16xf32> to vector<2x16x16xf32>
    %8 = vector.shape_cast %7 : vector<2x16x16xf32> to vector<32x16xf32>
    %c1 = arith.constant 1 : index
    %c0_9 = arith.constant 0 : index
    %c0_10 = arith.constant 0 : index
    %9 = vector.load %arg3[%c1, %c0_9, %c0_10] : memref<4x16x64xf32, #tpu.memory_space<vmem>>, vector<1x16x64xf32>
    %10 = vector.shape_cast %9 : vector<1x16x64xf32> to vector<16x64xf32>
    %cst_11 = arith.constant dense<0.000000e+00> : vector<32x64xf32>
    %11 = tpu.matmul %8, %10, %cst_11 {dimension_numbers = #tpu.dot_dimension_numbers<[1], [0], [0], [1], [0, 0, 1, 1], [], []>} : vector<32x16xf32>, vector<16x64xf32>, vector<32x64xf32> -> vector<32x64xf32>
    %12 = arith.addf %5, %11 : vector<32x64xf32>
    %c0_12 = arith.constant 0 : index
    %c4 = arith.constant 4 : index
    %c0_13 = arith.constant 0 : index
    %c0_14 = arith.constant 0 : index
    %13 = vector.load %arg2[%c0_12, %c4, %c0_13, %c0_14] : memref<1x8x16x16xf32, #tpu.memory_space<vmem>>, vector<1x2x16x16xf32>
    %14 = vector.shape_cast %13 : vector<1x2x16x16xf32> to vector<2x16x16xf32>
    %15 = vector.shape_cast %14 : vector<2x16x16xf32> to vector<32x16xf32>
    %c2_15 = arith.constant 2 : index
    %c0_16 = arith.constant 0 : index
    %c0_17 = arith.constant 0 : index
    %16 = vector.load %arg3[%c2_15, %c0_16, %c0_17] : memref<4x16x64xf32, #tpu.memory_space<vmem>>, vector<1x16x64xf32>
    %17 = vector.shape_cast %16 : vector<1x16x64xf32> to vector<16x64xf32>
    %cst_18 = arith.constant dense<0.000000e+00> : vector<32x64xf32>
    %18 = tpu.matmul %15, %17, %cst_18 {dimension_numbers = #tpu.dot_dimension_numbers<[1], [0], [0], [1], [0, 0, 1, 1], [], []>} : vector<32x16xf32>, vector<16x64xf32>, vector<32x64xf32> -> vector<32x64xf32>
    %19 = arith.addf %12, %18 : vector<32x64xf32>
    %c0_19 = arith.constant 0 : index
    %c6 = arith.constant 6 : index
    %c0_20 = arith.constant 0 : index
    %c0_21 = arith.constant 0 : index
    %20 = vector.load %arg2[%c0_19, %c6, %c0_20, %c0_21] : memref<1x8x16x16xf32, #tpu.memory_space<vmem>>, vector<1x2x16x16xf32>
    %21 = vector.shape_cast %20 : vector<1x2x16x16xf32> to vector<2x16x16xf32>
    %22 = vector.shape_cast %21 : vector<2x16x16xf32> to vector<32x16xf32>
    %c3 = arith.constant 3 : index
    %c0_22 = arith.constant 0 : index
    %c0_23 = arith.constant 0 : index
    %23 = vector.load %arg3[%c3, %c0_22, %c0_23] : memref<4x16x64xf32, #tpu.memory_space<vmem>>, vector<1x16x64xf32>
    %24 = vector.shape_cast %23 : vector<1x16x64xf32> to vector<16x64xf32>
    %cst_24 = arith.constant dense<0.000000e+00> : vector<32x64xf32>
    %25 = tpu.matmul %22, %24, %cst_24 {dimension_numbers = #tpu.dot_dimension_numbers<[1], [0], [0], [1], [0, 0, 1, 1], [], []>} : vector<32x16xf32>, vector<16x64xf32>, vector<32x64xf32> -> vector<32x64xf32>
    %26 = arith.addf %19, %25 : vector<32x64xf32>
    %27 = vector.shape_cast %26 : vector<32x64xf32> to vector<2x16x64xf32>
    %c0_25 = arith.constant 0 : index
    %c0_26 = arith.constant 0 : index
    %c0_27 = arith.constant 0 : index
    %c0_28 = arith.constant 0 : index
    %28 = vector.load %arg4[%c0_25, %c0_26, %c0_27, %c0_28] : memref<1x2x16x64xf32, #tpu.memory_space<vmem>>, vector<1x2x16x64xf32>
    %29 = vector.shape_cast %28 : vector<1x2x16x64xf32> to vector<2x16x64xf32>
    %30 = vector.shape_cast %27 : vector<2x16x64xf32> to vector<1x2x16x64xf32>
    tpu.vector_store %arg4[%c0_25, %c0_26, %c0_27, %c0_28], %30 {strides = array<i32>} : memref<1x2x16x64xf32, #tpu.memory_space<vmem>>, vector<1x2x16x64xf32>,
    return
  }
  func.func @transform_0(%arg0: i32, %arg1: i32) -> (i32, i32, i32, i32) {
    %c0_i32 = arith.constant 0 : i32
    %c0_i32_0 = arith.constant 0 : i32
    %c0_i32_1 = arith.constant 0 : i32
    return %arg0, %c0_i32, %arg1, %c0_i32_0 : i32, i32, i32, i32
  }
  func.func @transform_1(%arg0: i32, %arg1: i32) -> (i32, i32, i32) {
    %c0_i32 = arith.constant 0 : i32
    %c0_i32_0 = arith.constant 0 : i32
    %c0_i32_1 = arith.constant 0 : i32
    %c0_i32_2 = arith.constant 0 : i32
    return %c0_i32, %c0_i32_0, %c0_i32_1 : i32, i32, i32
  }
  func.func @transform_2(%arg0: i32, %arg1: i32) -> (i32, i32, i32, i32) {
    %c0_i32 = arith.constant 0 : i32
    %c0_i32_0 = arith.constant 0 : i32
    %c0_i32_1 = arith.constant 0 : i32
    return %arg0, %c0_i32, %arg1, %c0_i32_0 : i32, i32, i32, i32
  }
}

</mosaic_0001>

<llo_original>
// kernel: tpu_custom_call.1
$region0: #{tpu_custom_call.1}
  #allocation0 [shape = 'u32[]', space=smem, size = 0x4, offset = 0x4, fixed_abs, tag = 'smem constant byte address 0x4 - core index']
  #allocation1 [shape = 'u32[144,128]{1,0:T(1,128)}', space=vmem, size = 0x12000, scoped, tag = 'internal scratch']
  %s0 = inlined_call_operand.hbm [shape: f32[2,8,16,16], index: 0, kind: input, shape index: {}]
  %s1 = inlined_call_operand.hbm [shape: f32[4,16,64], index: 1, kind: input, shape index: {}]
  %s2 = inlined_call_operand.hbm [shape: f32[2,2,16,64], index: 2, kind: output, shape index: {}]
  %s3 = sld [smem:[#allocation0]]
  $region49: #{tpu_custom_call.1} parent=0
    _
  %s5 = ssub.s32 1, %s3
  %s6 = scalar_select 0, %s5, %s3
  $region1: #{tpu_custom_call.1} parent=0
    #allocation2 [shape = 'u8[131072]{0}', space=vmem, size = 0x20000, scoped, tag = 'input window, operand 0']
    #allocation3 [shape = 's32[2]{0}', space=sflag, size = 0x8, scoped, tag = 'scoped memory for tpu_custom_call.1']
    #allocation4 [shape = 's32[2]{0}', space=sflag, size = 0x8, scoped, tag = 'scoped memory for tpu_custom_call.1']
    #allocation5 [shape = 'u8[32768]{0}', space=vmem, size = 0x8000, scoped, tag = 'input window, operand 1, single buffered']
    #allocation6 [shape = 's32[1]{0}', space=sflag, size = 0x4, scoped, tag = 'scoped memory for tpu_custom_call.1']
    #allocation7 [shape = 'u8[32768]{0}', space=vmem, size = 0x8000, scoped, tag = 'output window, operand 0']
    %7 = vsyncpa [#allocation3], 0
    %s8 = scalar_lea.sflag [#allocation3], 1
    %9 = vsyncpa %s8, 0
    %10 = vsyncpa [#allocation6], 0
    %11 = vsyncpa [#allocation4], 0
    %s12 = scalar_lea.sflag [#allocation4], 1
    %13 = vsyncpa %s12, 0
    loop: start=0, step=1, limit=4
    $region2: #{tpu_custom_call.1} parent=1 // loop_pre_header
      _
    $region3: #{tpu_custom_call.1} parent=1 // loop_header
      %s15 = sphi 0, %s19
      %p16 = scmp.ge.s32.totalorder %s15, 4
      %s22 = sphi 0, %s34
      %s23 = sphi 0, %s30
      %s24 = sphi 0, %s22
      %s25 = sphi 0, %s23
      %s26 = sphi 0, %s24
      %s27 = sphi 0, %s25
      %s39 = sphi 0, %s41
      %s42 = sphi 0, %s39
      %s43 = sphi 0, %s42
      %s59 = sphi 0, %s43
      %s63 = sphi 0, %s63
      %s65 = sphi 0, %s63
      %s66 = sphi 0, %s65
      %s80 = sphi 0, %s66
      %s88 = sphi 0, %s90
      %s91 = sphi 0, %s88
      %s92 = sphi 0, %s91
      %s108 = sphi 0, %s92
    $region4: #{tpu_custom_call.1} parent=1 // loop_header_branch
      %18 = sbr.rel (%p16) target = $region8
    $region5: #{tpu_custom_call.1} parent=1 // loop_body
      %s20 = ssub.s32 %s15, 1
      %s21 = ssub.s32 %s15, 2
      %s28 = sadd.s32 1, %s23
      %p29 = scmp.ge.s32.totalorder %s28, 1
      %s30 = scalar_select %p29, 0, %s28
      %s31 = sadd.s32 1, %s22
      %s32 = scalar_select %p29, %s31, %s22
      %p33 = scmp.ge.s32.totalorder %s32, 2
      %s34 = scalar_select %p33, 0, %s32
      %s35 = ssub.s32 %s22, %s34
      %s36 = ssub.s32 %s23, %s30
      %s37 = sor.u32 %s35, %s36
      %p38 = scmp.eq.s32.totalorder %s37, 0
      %s40 = sadd.s32 %s39, 1
      %s41 = scalar_select %p38, %s39, %s40
      %p44 = pneg %p38
      %p45 = scmp.eq.s32.totalorder %s15, 1
      %p46 = por %p44, %p45
      %p47 = scmp.ne.s32.totalorder %s39, %s42
      %p48 = scmp.eq.s32.totalorder %s15, 0
      %p49 = por %p47, %p48
      %p50 = scmp.ne.s32.totalorder %s39, %s42
      %p51 = scmp.eq.s32.totalorder %s20, 1
      %p52 = por %p50, %p51
      %p53 = scmp.ne.s32.totalorder %s42, %s43
      %p54 = scmp.eq.s32.totalorder %s20, 0
      %p55 = por %p53, %p54
      %p56 = scmp.ne.s32.totalorder %s42, %s43
      %p57 = scmp.eq.s32.totalorder %s21, 1
      %p58 = por %p56, %p57
      %p60 = scmp.ne.s32.totalorder %s43, %s59
      %p61 = scmp.eq.s32.totalorder %s21, 0
      %p62 = por %p60, %p61
      %s64 = sadd.s32 %s63, 1
      %p67 = scmp.eq.s32.totalorder %s15, 1
      %p68 = scmp.ne.s32.totalorder %s63, %s65
      %p69 = scmp.eq.s32.totalorder %s15, 0
      %p70 = por %p68, %p69
      %p71 = scmp.ne.s32.totalorder %s63, %s65
      %p72 = scmp.eq.s32.totalorder %s20, 1
      %p73 = por %p71, %p72
      %p74 = scmp.ne.s32.totalorder %s65, %s66
      %p75 = scmp.eq.s32.totalorder %s20, 0
      %p76 = por %p74, %p75
      %p77 = scmp.ne.s32.totalorder %s65, %s66
      %p78 = scmp.eq.s32.totalorder %s21, 1
      %p79 = por %p77, %p78
      %p81 = scmp.ne.s32.totalorder %s66, %s80
      %p82 = scmp.eq.s32.totalorder %s21, 0
      %p83 = por %p81, %p82
      %s84 = ssub.s32 %s22, %s34
      %s85 = ssub.s32 %s23, %s30
      %s86 = sor.u32 %s84, %s85
      %p87 = scmp.eq.s32.totalorder %s86, 0
      %s89 = sadd.s32 %s88, 1
      %s90 = scalar_select %p87, %s88, %s89
      %p93 = pneg %p87
      %p94 = scmp.eq.s32.totalorder %s15, 1
      %p95 = por %p93, %p94
      %p96 = scmp.ne.s32.totalorder %s88, %s91
      %p97 = scmp.eq.s32.totalorder %s15, 0
      %p98 = por %p96, %p97
      %p99 = scmp.ne.s32.totalorder %s88, %s91
      %p100 = scmp.eq.s32.totalorder %s20, 1
      %p101 = por %p99, %p100
      %p102 = scmp.ne.s32.totalorder %s91, %s92
      %p103 = scmp.eq.s32.totalorder %s20, 0
      %p104 = por %p102, %p103
      %p105 = scmp.ne.s32.totalorder %s91, %s92
      %p106 = scmp.eq.s32.totalorder %s21, 1
      %p107 = por %p105, %p106
      %p109 = scmp.ne.s32.totalorder %s92, %s108
      %p110 = scmp.eq.s32.totalorder %s21, 0
      %p111 = por %p109, %p110
      %p112 = scmp.le.s32.totalorder 1, %s15
      %p113 = scmp.lt.s32.totalorder %s15, 3
      %p114 = pnand %p112, %p113
      %p115 = pneg %p114
      // Predicated region
      $region9: #{tpu_custom_call.1} parent=5 // pred_check
        _
      $region10: #{tpu_custom_call.1} parent=5 // pred_check_branch
        %117 = sbr.rel (%p114) target = $region12
      $region11: #{tpu_custom_call.1} parent=5 // pred_region
        %s118 = ssub.s32 %s15, 1
        // Predicated region
        $region13: #{tpu_custom_call.1} parent=11 // pred_check
          %p119 = pneg %p76
        $region14: #{tpu_custom_call.1} parent=11 // pred_check_branch
          %121 = sbr.rel (%p119) target = $region16
        $region15: #{tpu_custom_call.1} parent=11 // pred_region
          %s123 = ssub.s32 1024, 1024
          %124 = vsyncadd [#allocation6], %s123
          %s125 = sshll.u32 [#allocation5], 4
          %s126 = int_to_ptr.vmem [resolvable:$true] %s125
          %131 = dma.hbm_to_vmem [thread:$0]  %s1, 1024, %s126, [#allocation6], 128, 128, 8
        $region16: #{tpu_custom_call.1} parent=11 // pred_fallthru
          _
      $region12: #{tpu_custom_call.1} parent=5 // pred_fallthru
        _
      %p132 = scmp.lt.s32.totalorder %s15, 2
      // Predicated region
      $region17: #{tpu_custom_call.1} parent=5 // pred_check
        %p133 = pneg %p132
      $region18: #{tpu_custom_call.1} parent=5 // pred_check_branch
        %135 = sbr.rel (%p133) target = $region20
      $region19: #{tpu_custom_call.1} parent=5 // pred_region
        // Predicated region
        $region21: #{tpu_custom_call.1} parent=19 // pred_check
          %p136 = pneg %p49
        $region22: #{tpu_custom_call.1} parent=19 // pred_check_branch
          %138 = sbr.rel (%p136) target = $region24
        $region23: #{tpu_custom_call.1} parent=19 // pred_region
          %s139 = sand.u32 %s39, 1
          %s140 = scalar_lea.sflag [#allocation3], %s139
          %s141 = sand.u32 %s39, 1
          %s142 = smul.addr %s141, 128
          %s143 = scalar_lea.vmem [#allocation2], %s142
          %s144 = smul.u32 2, %s23
          %s146 = ssub.s32 2048, 2048
          %147 = vsyncadd %s140, %s146
          %s148 = smul.addr %s22, 16
          %s149 = sadd.s32 %s144, %s148
          %s150 = smul.addr %s149, 128
          %s151 = scalar_lea.hbm %s0, %s150
          %s152 = sshll.u32 %s143, 4
          %s153 = int_to_ptr.vmem [resolvable:$true] %s152
          %158 = dma.hbm_to_vmem [thread:$0]  %s151, 2048, %s153, %s140, 128, 128, 8
        $region24: #{tpu_custom_call.1} parent=19 // pred_fallthru
          _
      $region20: #{tpu_custom_call.1} parent=5 // pred_fallthru
        _
      %p159 = scmp.le.s32.totalorder 1, %s15
      %p160 = scmp.lt.s32.totalorder %s15, 3
      %p161 = pnand %p159, %p160
      %p162 = pneg %p161
      // Predicated region
      $region25: #{tpu_custom_call.1} parent=5 // pred_check
        _
      $region26: #{tpu_custom_call.1} parent=5 // pred_check_branch
        %164 = sbr.rel (%p161) target = $region28
      $region27: #{tpu_custom_call.1} parent=5 // pred_region
        %s165 = ssub.s32 %s15, 1
        %s166 = sand.u32 %s42, 1
        %s167 = scalar_lea.sflag [#allocation3], %s166
        %s168 = sand.u32 %s42, 1
        %s169 = smul.addr %s168, 128
        %s170 = scalar_lea.vmem [#allocation2], %s169
        // Predicated region
        $region29: #{tpu_custom_call.1} parent=27 // pred_check
          %p171 = pneg %p55
        $region30: #{tpu_custom_call.1} parent=27 // pred_check_branch
          %173 = sbr.rel (%p171) target = $region32
        $region31: #{tpu_custom_call.1} parent=27 // pred_region
          %174 = dma.done %s167, 2048
        $region32: #{tpu_custom_call.1} parent=27 // pred_fallthru
          _
        // Predicated region
        $region33: #{tpu_custom_call.1} parent=27 // pred_check
          %p175 = pneg %p76
        $region34: #{tpu_custom_call.1} parent=27 // pred_check_branch
          %177 = sbr.rel (%p175) target = $region36
        $region35: #{tpu_custom_call.1} parent=27 // pred_region
          %178 = dma.done [#allocation6], 1024
        $region36: #{tpu_custom_call.1} parent=27 // pred_fallthru
          _
        %s179 = sand.u32 %s42, 1
        %s180 = scalar_lea.sflag [#allocation3], %s179
        %s181 = sand.u32 %s42, 1
        %s182 = smul.addr %s181, 128
        %s183 = scalar_lea.vmem [#allocation2], %s182
        %p184 = pneg %p55
        %p185 = pneg %p52
        %p186 = pneg %p76
        %p187 = pneg %p73
        %p188 = pneg %p104
        %p189 = pneg %p101
        %s190 = sand.u32 %s91, 1
        %s191 = scalar_lea.sflag [#allocation4], %s190
        %s192 = sand.u32 %s91, 1
        %s193 = smul.addr %s192, 32
        %s194 = scalar_lea.vmem [#allocation7], %s193
        %s195 = smul.u32 2, %s25
        %s196 = smul.u32 2, %s25
        %v197 = vld [vmem:[%s170] sm:$0xff]
        %v198 = vld [vmem:[%s170 + $0x8] sm:$0xff]
        %v199 = vld [vmem:[%s170 + $0x10] sm:$0xff]
        %v200 = vld [vmem:[%s170 + $0x18] sm:$0xff]
        %v201 = vld [vmem:[#allocation5] sm:$0xff]
        %v202 = vld [vmem:[#allocation5 + $0x8] sm:$0xff]
        %s203 = scalar_lea.vmem %s170, 32 [#allocation2]
        %v204 = vld [vmem:[%s203] sm:$0xff]
        %v205 = vld [vmem:[%s203 + $0x8] sm:$0xff]
        %v206 = vld [vmem:[%s203 + $0x10] sm:$0xff]
        %v207 = vld [vmem:[%s203 + $0x18] sm:$0xff]
        %s208 = scalar_lea.vmem [#allocation5], 16
        %v209 = vld [vmem:[%s208] sm:$0xff]
        %v210 = vld [vmem:[%s208 + $0x8] sm:$0xff]
        %vm211 = vcmask 130048
        %v213 = vsel %vm211, %v204, 0
        %v216 = vsel %vm211, %v205, 0
        %v219 = vsel %vm211, %v206, 0
        %v222 = vsel %vm211, %v207, 0
        %224 = vmatprep.subr.mxu0 0.0
        %225 = vmatpush1.msra.mxu0 %v209
        %226 = vmatprep.subr.mxu0 0.0
        %227 = vmatpush1.msra.mxu0 %v210
        %228 = vmatprep.subr.mxu0 0.0
        %229 = vmatpush1.msra.mxu0 0.0
        %230 = vmatprep.subr.mxu0 0.0
        %231 = vmatpush1.msra.mxu0 0.0
        %232 = vmatprep.subr.mxu0 0.0
        %233 = vmatpush1.msra.mxu0 0.0
        %234 = vmatprep.subr.mxu0 0.0
        %235 = vmatpush1.msra.mxu0 0.0
        %236 = vmatprep.subr.mxu0 0.0
        %237 = vmatpush1.msra.mxu0 0.0
        %238 = vmatprep.subr.mxu0 0.0
        %239 = vmatpush1.msra.mxu0 0.0
        %240 = vmatprep.subr.mxu0 0.0
        %241 = vmatpush1.msra.mxu0 0.0
        %242 = vmatprep.subr.mxu0 0.0
        %243 = vmatpush1.msra.mxu0 0.0
        %244 = vmatprep.subr.mxu0 0.0
        %245 = vmatpush1.msra.mxu0 0.0
        %246 = vmatprep.subr.mxu0 0.0
        %247 = vmatpush1.msra.mxu0 0.0
        %248 = vmatprep.subr.mxu0 0.0
        %249 = vmatpush1.msra.mxu0 0.0
        %250 = vmatprep.subr.mxu0 0.0
        %251 = vmatpush1.msra.mxu0 0.0
        %252 = vmatprep.subr.mxu0 0.0
        %253 = vmatpush1.msra.mxu0 0.0
        %254 = vmatprep.subr.mxu0 0.0
        %255 = vmatpush1.msra.mxu0 0.0
        %256 = vmatprep.subr.mxu0 0.0
        %257 = vmatpush1.msra.mxu0 0.0
        %258 = vmatprep.subr.mxu0 0.0
        %259 = vmatpush1.msra.mxu0 0.0
        %260 = vmatprep.subr.mxu0 0.0
        %261 = vmatpush1.msra.mxu0 0.0
        %262 = vmatprep.subr.mxu0 0.0
        %263 = vmatpush1.msra.mxu0 0.0
        %264 = vmatprep.subr.mxu0 0.0
        %265 = vmatpush1.msra.mxu0 0.0
        %266 = vmatprep.subr.mxu0 0.0
        %267 = vmatpush1.msra.mxu0 0.0
        %268 = vmatprep.subr.mxu0 0.0
        %269 = vmatpush1.msra.mxu0 0.0
        %270 = vmatprep.subr.mxu0 0.0
        %271 = vmatpush1.msra.mxu0 0.0
        %272 = vmatprep.subr.mxu0 0.0
        %273 = vmatpush1.msra.mxu0 0.0
        %274 = vmatprep.subr.mxu0 0.0
        %275 = vmatpush1.msra.mxu0 0.0
        %276 = vmatprep.subr.mxu0 0.0
        %277 = vmatpush1.msra.mxu0 0.0
        %278 = vmatprep.subr.mxu0 0.0
        %279 = vmatpush1.msra.mxu0 0.0
        %280 = vmatprep.subr.mxu0 0.0
        %281 = vmatpush1.msra.mxu0 0.0
        %282 = vmatprep.subr.mxu0 0.0
        %283 = vmatpush1.msra.mxu0 0.0
        %284 = vmatprep.subr.mxu0 0.0
        %285 = vmatpush1.msra.mxu0 0.0
        %286 = vmatprep.subr.mxu0 0.0
        %287 = vmatpush1.msra.mxu0 0.0
        %288 = vmatprep.mubr.f32.mxu0 0.0
        %289 = vmatmul.mubr.f32.gmra.mrb[0].mxu0 %v213
        %v290 = vpop.f32.mrb[0].mxu0
        %v291 = vadd.f32 0.0, %v290
        %v292 = vpop.f32.mrb[0].mxu0
        %293 = vmatprep.mubr.f32.mxu0 0.0
        %294 = vmatmul.mubr.f32.gmra.mrb[0].mxu0 %v216
        %v295 = vpop.f32.mrb[0].mxu0
        %v296 = vadd.f32 0.0, %v295
        %v297 = vpop.f32.mrb[0].mxu0
        %298 = vmatprep.mubr.f32.mxu0 0.0
        %299 = vmatmul.mubr.f32.gmra.mrb[0].mxu0 %v219
        %v300 = vpop.f32.mrb[0].mxu0
        %v301 = vadd.f32 0.0, %v300
        %v302 = vpop.f32.mrb[0].mxu0
        %303 = vmatprep.mubr.f32.mxu0 0.0
        %304 = vmatmul.mubr.f32.gmra.mrb[0].mxu0 %v222
        %v305 = vpop.f32.mrb[0].mxu0
        %v306 = vadd.f32 0.0, %v305
        %v307 = vpop.f32.mrb[0].mxu0
        %308 = vdwg.mxu0
        %v310 = vsel %vm211, %v197, 0
        %v313 = vsel %vm211, %v198, 0
        %v316 = vsel %vm211, %v199, 0
        %v319 = vsel %vm211, %v200, 0
        %321 = vmatprep.subr.mxu0 0.0
        %322 = vmatpush1.msra.mxu0 %v201
        %323 = vmatprep.subr.mxu0 0.0
        %324 = vmatpush1.msra.mxu0 %v202
        %325 = vmatprep.subr.mxu0 0.0
        %326 = vmatpush1.msra.mxu0 0.0
        %327 = vmatprep.subr.mxu0 0.0
        %328 = vmatpush1.msra.mxu0 0.0
        %329 = vmatprep.subr.mxu0 0.0
        %330 = vmatpush1.msra.mxu0 0.0
        %331 = vmatprep.subr.mxu0 0.0
        %332 = vmatpush1.msra.mxu0 0.0
        %333 = vmatprep.subr.mxu0 0.0
        %334 = vmatpush1.msra.mxu0 0.0
        %335 = vmatprep.subr.mxu0 0.0
        %336 = vmatpush1.msra.mxu0 0.0
        %337 = vmatprep.subr.mxu0 0.0
        %338 = vmatpush1.msra.mxu0 0.0
        %339 = vmatprep.subr.mxu0 0.0
        %340 = vmatpush1.msra.mxu0 0.0
        %341 = vmatprep.subr.mxu0 0.0
        %342 = vmatpush1.msra.mxu0 0.0
        %343 = vmatprep.subr.mxu0 0.0
        %344 = vmatpush1.msra.mxu0 0.0
        %345 = vmatprep.subr.mxu0 0.0
        %346 = vmatpush1.msra.mxu0 0.0
        %347 = vmatprep.subr.mxu0 0.0
        %348 = vmatpush1.msra.mxu0 0.0
        %349 = vmatprep.subr.mxu0 0.0
        %350 = vmatpush1.msra.mxu0 0.0
        %351 = vmatprep.subr.mxu0 0.0
        %352 = vmatpush1.msra.mxu0 0.0
        %353 = vmatprep.subr.mxu0 0.0
        %354 = vmatpush1.msra.mxu0 0.0
        %355 = vmatprep.subr.mxu0 0.0
        %356 = vmatpush1.msra.mxu0 0.0
        %357 = vmatprep.subr.mxu0 0.0
        %358 = vmatpush1.msra.mxu0 0.0
        %359 = vmatprep.subr.mxu0 0.0
        %360 = vmatpush1.msra.mxu0 0.0
        %361 = vmatprep.subr.mxu0 0.0
        %362 = vmatpush1.msra.mxu0 0.0
        %363 = vmatprep.subr.mxu0 0.0
        %364 = vmatpush1.msra.mxu0 0.0
        %365 = vmatprep.subr.mxu0 0.0
        %366 = vmatpush1.msra.mxu0 0.0
        %367 = vmatprep.subr.mxu0 0.0
        %368 = vmatpush1.msra.mxu0 0.0
        %369 = vmatprep.subr.mxu0 0.0
        %370 = vmatpush1.msra.mxu0 0.0
        %371 = vmatprep.subr.mxu0 0.0
        %372 = vmatpush1.msra.mxu0 0.0
        %373 = vmatprep.subr.mxu0 0.0
        %374 = vmatpush1.msra.mxu0 0.0
        %375 = vmatprep.subr.mxu0 0.0
        %376 = vmatpush1.msra.mxu0 0.0
        %377 = vmatprep.subr.mxu0 0.0
        %378 = vmatpush1.msra.mxu0 0.0
        %379 = vmatprep.subr.mxu0 0.0
        %380 = vmatpush1.msra.mxu0 0.0
        %381 = vmatprep.subr.mxu0 0.0
        %382 = vmatpush1.msra.mxu0 0.0
        %383 = vmatprep.subr.mxu0 0.0
        %384 = vmatpush1.msra.mxu0 0.0
        %385 = vmatprep.mubr.f32.mxu0 0.0
        %386 = vmatmul.mubr.f32.gmra.mrb[0].mxu0 %v310
        %v387 = vpop.f32.mrb[0].mxu0
        %v388 = vadd.f32 %v291, %v387
        %v389 = vpop.f32.mrb[0].mxu0
        %390 = vmatprep.mubr.f32.mxu0 0.0
        %391 = vmatmul.mubr.f32.gmra.mrb[0].mxu0 %v313
        %v392 = vpop.f32.mrb[0].mxu0
        %v393 = vadd.f32 %v296, %v392
        %v394 = vpop.f32.mrb[0].mxu0
        %395 = vmatprep.mubr.f32.mxu0 0.0
        %396 = vmatmul.mubr.f32.gmra.mrb[0].mxu0 %v316
        %v397 = vpop.f32.mrb[0].mxu0
        %v398 = vadd.f32 %v301, %v397
        %v399 = vpop.f32.mrb[0].mxu0
        %400 = vmatprep.mubr.f32.mxu0 0.0
        %401 = vmatmul.mubr.f32.gmra.mrb[0].mxu0 %v319
        %v402 = vpop.f32.mrb[0].mxu0
        %v403 = vadd.f32 %v306, %v402
        %v404 = vpop.f32.mrb[0].mxu0
        %405 = vdwg.mxu0
        %s406 = scalar_lea.vmem %s170, 64 [#allocation2]
        %v407 = vld [vmem:[%s406] sm:$0xff]
        %v408 = vld [vmem:[%s406 + $0x8] sm:$0xff]
        %v409 = vld [vmem:[%s406 + $0x10] sm:$0xff]
        %v410 = vld [vmem:[%s406 + $0x18] sm:$0xff]
        %s411 = scalar_lea.vmem [#allocation5], 32
        %v412 = vld [vmem:[%s411] sm:$0xff]
        %v413 = vld [vmem:[%s411 + $0x8] sm:$0xff]
        %v415 = vsel %vm211, %v407, 0
        %v418 = vsel %vm211, %v408, 0
        %v421 = vsel %vm211, %v409, 0
        %v424 = vsel %vm211, %v410, 0
        %426 = vmatprep.subr.mxu0 0.0
        %427 = vmatpush1.msra.mxu0 %v412
        %428 = vmatprep.subr.mxu0 0.0
        %429 = vmatpush1.msra.mxu0 %v413
        %430 = vmatprep.subr.mxu0 0.0
        %431 = vmatpush1.msra.mxu0 0.0
        %432 = vmatprep.subr.mxu0 0.0
        %433 = vmatpush1.msra.mxu0 0.0
        %434 = vmatprep.subr.mxu0 0.0
        %435 = vmatpush1.msra.mxu0 0.0
        %436 = vmatprep.subr.mxu0 0.0
        %437 = vmatpush1.msra.mxu0 0.0
        %438 = vmatprep.subr.mxu0 0.0
        %439 = vmatpush1.msra.mxu0 0.0
        %440 = vmatprep.subr.mxu0 0.0
        %441 = vmatpush1.msra.mxu0 0.0
        %442 = vmatprep.subr.mxu0 0.0
        %443 = vmatpush1.msra.mxu0 0.0
        %444 = vmatprep.subr.mxu0 0.0
        %445 = vmatpush1.msra.mxu0 0.0
        %446 = vmatprep.subr.mxu0 0.0
        %447 = vmatpush1.msra.mxu0 0.0
        %448 = vmatprep.subr.mxu0 0.0
        %449 = vmatpush1.msra.mxu0 0.0
        %450 = vmatprep.subr.mxu0 0.0
        %451 = vmatpush1.msra.mxu0 0.0
        %452 = vmatprep.subr.mxu0 0.0
        %453 = vmatpush1.msra.mxu0 0.0
        %454 = vmatprep.subr.mxu0 0.0
        %455 = vmatpush1.msra.mxu0 0.0
        %456 = vmatprep.subr.mxu0 0.0
        %457 = vmatpush1.msra.mxu0 0.0
        %458 = vmatprep.subr.mxu0 0.0
        %459 = vmatpush1.msra.mxu0 0.0
        %460 = vmatprep.subr.mxu0 0.0
        %461 = vmatpush1.msra.mxu0 0.0
        %462 = vmatprep.subr.mxu0 0.0
        %463 = vmatpush1.msra.mxu0 0.0
        %464 = vmatprep.subr.mxu0 0.0
        %465 = vmatpush1.msra.mxu0 0.0
        %466 = vmatprep.subr.mxu0 0.0
        %467 = vmatpush1.msra.mxu0 0.0
        %468 = vmatprep.subr.mxu0 0.0
        %469 = vmatpush1.msra.mxu0 0.0
        %470 = vmatprep.subr.mxu0 0.0
        %471 = vmatpush1.msra.mxu0 0.0
        %472 = vmatprep.subr.mxu0 0.0
        %473 = vmatpush1.msra.mxu0 0.0
        %474 = vmatprep.subr.mxu0 0.0
        %475 = vmatpush1.msra.mxu0 0.0
        %476 = vmatprep.subr.mxu0 0.0
        %477 = vmatpush1.msra.mxu0 0.0
        %478 = vmatprep.subr.mxu0 0.0
        %479 = vmatpush1.msra.mxu0 0.0
        %480 = vmatprep.subr.mxu0 0.0
        %481 = vmatpush1.msra.mxu0 0.0
        %482 = vmatprep.subr.mxu0 0.0
        %483 = vmatpush1.msra.mxu0 0.0
        %484 = vmatprep.subr.mxu0 0.0
        %485 = vmatpush1.msra.mxu0 0.0
        %486 = vmatprep.subr.mxu0 0.0
        %487 = vmatpush1.msra.mxu0 0.0
        %488 = vmatprep.subr.mxu0 0.0
        %489 = vmatpush1.msra.mxu0 0.0
        %490 = vmatprep.mubr.f32.mxu0 0.0
        %491 = vmatmul.mubr.f32.gmra.mrb[0].mxu0 %v415
        %v492 = vpop.f32.mrb[0].mxu0
        %v493 = vadd.f32 0.0, %v492
        %v494 = vpop.f32.mrb[0].mxu0
        %495 = vmatprep.mubr.f32.mxu0 0.0
        %496 = vmatmul.mubr.f32.gmra.mrb[0].mxu0 %v418
        %v497 = vpop.f32.mrb[0].mxu0
        %v498 = vadd.f32 0.0, %v497
        %v499 = vpop.f32.mrb[0].mxu0
        %500 = vmatprep.mubr.f32.mxu0 0.0
        %501 = vmatmul.mubr.f32.gmra.mrb[0].mxu0 %v421
        %v502 = vpop.f32.mrb[0].mxu0
        %v503 = vadd.f32 0.0, %v502
        %v504 = vpop.f32.mrb[0].mxu0
        %505 = vmatprep.mubr.f32.mxu0 0.0
        %506 = vmatmul.mubr.f32.gmra.mrb[0].mxu0 %v424
        %v507 = vpop.f32.mrb[0].mxu0
        %v508 = vadd.f32 0.0, %v507
        %v509 = vpop.f32.mrb[0].mxu0
        %510 = vdwg.mxu0
        %v511 = vadd.f32 %v388, %v493
        %v512 = vadd.f32 %v393, %v498
        %v513 = vadd.f32 %v398, %v503
        %v514 = vadd.f32 %v403, %v508
        %s515 = scalar_lea.vmem %s170, 96 [#allocation2]
        %v516 = vld [vmem:[%s515] sm:$0xff]
        %v517 = vld [vmem:[%s515 + $0x8] sm:$0xff]
        %v518 = vld [vmem:[%s515 + $0x10] sm:$0xff]
        %v519 = vld [vmem:[%s515 + $0x18] sm:$0xff]
        %s520 = scalar_lea.vmem [#allocation5], 48
        %v521 = vld [vmem:[%s520] sm:$0xff]
        %v522 = vld [vmem:[%s520 + $0x8] sm:$0xff]
        %v524 = vsel %vm211, %v516, 0
        %v527 = vsel %vm211, %v517, 0
        %v530 = vsel %vm211, %v518, 0
        %v533 = vsel %vm211, %v519, 0
        %535 = vmatprep.subr.mxu0 0.0
        %536 = vmatpush1.msra.mxu0 %v521
        %537 = vmatprep.subr.mxu0 0.0
        %538 = vmatpush1.msra.mxu0 %v522
        %539 = vmatprep.subr.mxu0 0.0
        %540 = vmatpush1.msra.mxu0 0.0
        %541 = vmatprep.subr.mxu0 0.0
        %542 = vmatpush1.msra.mxu0 0.0
        %543 = vmatprep.subr.mxu0 0.0
        %544 = vmatpush1.msra.mxu0 0.0
        %545 = vmatprep.subr.mxu0 0.0
        %546 = vmatpush1.msra.mxu0 0.0
        %547 = vmatprep.subr.mxu0 0.0
        %548 = vmatpush1.msra.mxu0 0.0
        %549 = vmatprep.subr.mxu0 0.0
        %550 = vmatpush1.msra.mxu0 0.0
        %551 = vmatprep.subr.mxu0 0.0
        %552 = vmatpush1.msra.mxu0 0.0
        %553 = vmatprep.subr.mxu0 0.0
        %554 = vmatpush1.msra.mxu0 0.0
        %555 = vmatprep.subr.mxu0 0.0
        %556 = vmatpush1.msra.mxu0 0.0
        %557 = vmatprep.subr.mxu0 0.0
        %558 = vmatpush1.msra.mxu0 0.0
        %559 = vmatprep.subr.mxu0 0.0
        %560 = vmatpush1.msra.mxu0 0.0
        %561 = vmatprep.subr.mxu0 0.0
        %562 = vmatpush1.msra.mxu0 0.0
        %563 = vmatprep.subr.mxu0 0.0
        %564 = vmatpush1.msra.mxu0 0.0
        %565 = vmatprep.subr.mxu0 0.0
        %566 = vmatpush1.msra.mxu0 0.0
        %567 = vmatprep.subr.mxu0 0.0
        %568 = vmatpush1.msra.mxu0 0.0
        %569 = vmatprep.subr.mxu0 0.0
        %570 = vmatpush1.msra.mxu0 0.0
        %571 = vmatprep.subr.mxu0 0.0
        %572 = vmatpush1.msra.mxu0 0.0
        %573 = vmatprep.subr.mxu0 0.0
        %574 = vmatpush1.msra.mxu0 0.0
        %575 = vmatprep.subr.mxu0 0.0
        %576 = vmatpush1.msra.mxu0 0.0
        %577 = vmatprep.subr.mxu0 0.0
        %578 = vmatpush1.msra.mxu0 0.0
        %579 = vmatprep.subr.mxu0 0.0
        %580 = vmatpush1.msra.mxu0 0.0
        %581 = vmatprep.subr.mxu0 0.0
        %582 = vmatpush1.msra.mxu0 0.0
        %583 = vmatprep.subr.mxu0 0.0
        %584 = vmatpush1.msra.mxu0 0.0
        %585 = vmatprep.subr.mxu0 0.0
        %586 = vmatpush1.msra.mxu0 0.0
        %587 = vmatprep.subr.mxu0 0.0
        %588 = vmatpush1.msra.mxu0 0.0
        %589 = vmatprep.subr.mxu0 0.0
        %590 = vmatpush1.msra.mxu0 0.0
        %591 = vmatprep.subr.mxu0 0.0
        %592 = vmatpush1.msra.mxu0 0.0
        %593 = vmatprep.subr.mxu0 0.0
        %594 = vmatpush1.msra.mxu0 0.0
        %595 = vmatprep.subr.mxu0 0.0
        %596 = vmatpush1.msra.mxu0 0.0
        %597 = vmatprep.subr.mxu0 0.0
        %598 = vmatpush1.msra.mxu0 0.0
        %599 = vmatprep.mubr.f32.mxu0 0.0
        %600 = vmatmul.mubr.f32.gmra.mrb[0].mxu0 %v524
        %v601 = vpop.f32.mrb[0].mxu0
        %v602 = vadd.f32 0.0, %v601
        %v603 = vpop.f32.mrb[0].mxu0
        %604 = vmatprep.mubr.f32.mxu0 0.0
        %605 = vmatmul.mubr.f32.gmra.mrb[0].mxu0 %v527
        %v606 = vpop.f32.mrb[0].mxu0
        %v607 = vadd.f32 0.0, %v606
        %v608 = vpop.f32.mrb[0].mxu0
        %609 = vmatprep.mubr.f32.mxu0 0.0
        %610 = vmatmul.mubr.f32.gmra.mrb[0].mxu0 %v530
        %v611 = vpop.f32.mrb[0].mxu0
        %v612 = vadd.f32 0.0, %v611
        %v613 = vpop.f32.mrb[0].mxu0
        %614 = vmatprep.mubr.f32.mxu0 0.0
        %615 = vmatmul.mubr.f32.gmra.mrb[0].mxu0 %v533
        %v616 = vpop.f32.mrb[0].mxu0
        %v617 = vadd.f32 0.0, %v616
        %v618 = vpop.f32.mrb[0].mxu0
        %619 = vdwg.mxu0
        %v620 = vadd.f32 %v511, %v602
        %v621 = vadd.f32 %v512, %v607
        %v622 = vadd.f32 %v513, %v612
        %v623 = vadd.f32 %v514, %v617
        %vm624 = vcmask 523264
        %625 = vst.msk [vmem:[%s194] sm:$0xff] %vm624, %v620
        %626 = vst.msk [vmem:[%s194 + $0x8] sm:$0xff] %vm624, %v621
        %627 = vst.msk [vmem:[%s194 + $0x10] sm:$0xff] %vm624, %v622
        %628 = vst.msk [vmem:[%s194 + $0x18] sm:$0xff] %vm624, %v623
        %s629 = sand.u32 %s91, 1
        %s630 = scalar_lea.sflag [#allocation4], %s629
        %s631 = sand.u32 %s91, 1
        %s632 = smul.addr %s631, 32
        %s633 = scalar_lea.vmem [#allocation7], %s632
        // Predicated region
        $region37: #{tpu_custom_call.1} parent=27 // pred_check
          %p634 = pneg %p101
        $region38: #{tpu_custom_call.1} parent=27 // pred_check_branch
          %636 = sbr.rel (%p634) target = $region40
        $region39: #{tpu_custom_call.1} parent=27 // pred_region
          %s637 = smul.u32 2, %s25
          %s639 = ssub.s32 512, 512
          %640 = vsyncadd %s630, %s639
          %s641 = smul.addr %s24, 4
          %s642 = sadd.s32 %s637, %s641
          %s643 = smul.addr %s642, 128
          %s644 = scalar_lea.hbm %s2, %s643
          %s645 = sshll.u32 %s633, 4
          %s646 = int_to_ptr.vmem [resolvable:$true] %s645
          %651 = dma.vmem_to_hbm [thread:$0]  %s646, 512, %s644, %s630, 128, 128, 8
        $region40: #{tpu_custom_call.1} parent=27 // pred_fallthru
          _
      $region28: #{tpu_custom_call.1} parent=5 // pred_fallthru
        _
      %p652 = scmp.le.s32.totalorder 2, %s15
      // Predicated region
      $region41: #{tpu_custom_call.1} parent=5 // pred_check
        %p653 = pneg %p652
      $region42: #{tpu_custom_call.1} parent=5 // pred_check_branch
        %655 = sbr.rel (%p653) target = $region44
      $region43: #{tpu_custom_call.1} parent=5 // pred_region
        %s656 = ssub.s32 %s15, 2
        // Predicated region
        $region45: #{tpu_custom_call.1} parent=43 // pred_check
          %p657 = pneg %p107
        $region46: #{tpu_custom_call.1} parent=43 // pred_check_branch
          %659 = sbr.rel (%p657) target = $region48
        $region47: #{tpu_custom_call.1} parent=43 // pred_region
          %s660 = sand.u32 %s92, 1
          %s661 = scalar_lea.sflag [#allocation4], %s660
          %s662 = sand.u32 %s92, 1
          %s663 = smul.addr %s662, 32
          %s664 = scalar_lea.vmem [#allocation7], %s663
          %665 = dma.done %s661, 512
        $region48: #{tpu_custom_call.1} parent=43 // pred_fallthru
          _
      $region44: #{tpu_custom_call.1} parent=5 // pred_fallthru
        _
    $region6: #{tpu_custom_call.1} parent=1 // loop_footer
      %s19 = sadd.s32 1, %s15
    $region7: #{tpu_custom_call.1} parent=1 // loop_footer_branch
      %14 = sbr.rel target = $region3
    $region8: #{tpu_custom_call.1} parent=1 // loop_exit
      _
    %666 = vsyncpa [#allocation3], 1
    %s667 = scalar_lea.sflag [#allocation3], 1
    %668 = vsyncpa %s667, 1
    %669 = vsyncpa [#allocation6], 1
    %670 = vsyncpa [#allocation4], 1
    %s671 = scalar_lea.sflag [#allocation4], 1
    %672 = vsyncpa %s671, 1

</llo_original>
